<compile_context>
chip_gen: v6e
topology: v6e:2x2x1
jax: 0.10.0
libtpu: 0.0.40
codegen_flags: <defaults>
</compile_context>

<pallas_src>
import jax
import jax.numpy as jnp
from jax.experimental import pallas as pl
from jax.experimental.pallas import tpu as pltpu

NEG_SLOPE = 0.01  # torch.nn.LeakyReLU default negative_slope

_LANE = 128      # TPU lane width
_SUBLANE = 8     # TPU sublane width
_TM_MAX = 256    # batch tile
_TN_MAX = 512    # output-feature tile
_TK_MAX = 512    # reduction tile


def _round_up(x: int, m: int) -> int:
    return (x + m - 1) // m * m


def _largest_divisor_tile(dim: int, max_tile: int, granule: int = _LANE) -> int:
    """Largest multiple of `granule` <= max_tile that divides `dim` (dim is a granule multiple)."""
    best = granule
    t = granule
    while t <= min(dim, max_tile):
        if dim % t == 0:
            best = t
        t += granule
    return best


def _maybe_split_for_megacore(np_: int, tn: int, m_tiles: int) -> int:
    """If the parallel grid would have <2 tiles, split N so v7x's 2 TensorCores both get work."""
    if m_tiles * (np_ // tn) >= 2:
        return tn
    t = tn - _LANE
    while t >= _LANE:
        if np_ % t == 0 and np_ // t >= 2:
            return t
        t -= _LANE
    return tn


def prepare_params(weight, bias):
    """One-time parameter prep (NOT per forward call).

    weight: (out_features, in_features) PyTorch layout; bias: (out_features,).
    Returns lane-padded, pre-transposed weight (Kp, Np) and 2-D bias (1, Np).
    Padding is zero, so padded K rows / N columns never leak into results.
    """
    out_f, in_f = weight.shape
    kp = _round_up(in_f, _LANE)
    np_ = _round_up(out_f, _LANE)          # only to next 128 multiple (feedback #3)
    w_t = jnp.zeros((kp, np_), weight.dtype).at[:in_f, :out_f].set(weight.T)
    b2d = jnp.zeros((1, np_), bias.dtype).at[0, :out_f].set(bias)
    return w_t, b2d


def dim_increase_kernel(x_ref, w_ref, b_ref, o_ref, acc_ref):
    # x_ref: (tm, tk), w_ref: (tk, tn), b_ref: (1, tn), o_ref: (tm, tn), acc_ref: (tm, tn) f32
    k = pl.program_id(2)

    @pl.when(k == 0)
    def _():
        acc_ref[...] = jnp.zeros_like(acc_ref)

    acc_ref[...] += jnp.dot(x_ref[...], w_ref[...], preferred_element_type=jnp.float32)

    @pl.when(k == pl.num_programs(2) - 1)
    def _():
        y = acc_ref[...] + b_ref[...]             # bias broadcast, f32
        y = jnp.where(y > 0, y, NEG_SLOPE * y)    # LeakyReLU in f32 (v5e-friendly)
        o_ref[...] = y.astype(o_ref.dtype)        # single cast at the store


def dim_increase_forward(x, w_t, b2d, out_features):
    """x: (B, in_features); w_t/b2d from prepare_params. Returns (B, out_features)."""
    B, in_f = x.shape
    kp, np_ = w_t.shape

    # --- pad only the K (reduction) dim of x; no-op when in_features % 128 == 0 -------------
    # (Padded weight rows are zero, but x's K pad must also be zero so garbage can't make NaNs.)
    b_eff = B if B % _SUBLANE == 0 else _round_up(B, _SUBLANE)
    if b_eff != B or in_f != kp:
        x_p = jnp.zeros((b_eff, kp), x.dtype).at[:B, :in_f].set(x)
    else:
        x_p = x

    # --- tile selection (VMEM bounded to a few MiB regardless of in_features) ---------------
    tm = min(_round_up(b_eff, _SUBLANE), _TM_MAX)
    tk = _largest_divisor_tile(kp, _TK_MAX)
    tn = _largest_divisor_tile(np_, _TN_MAX)

    m_tiles = pl.cdiv(b_eff, tm)               # partial last M block handled by Pallas
    tn = _maybe_split_for_megacore(np_, tn, m_tiles)
    n_tiles = np_ // tn
    k_tiles = kp // tk

    # Grid order: N (outer, parallel), M (inner parallel), K (innermost, reduction).
    grid = (n_tiles, m_tiles, k_tiles)

    itemsize = jnp.dtype(x.dtype).itemsize
    cost = pl.CostEstimate(
        flops=2 * b_eff * np_ * kp,
        transcendentals=0,
        bytes_accessed=(x_p.size + w_t.size + b2d.size + b_eff * np_) * itemsize,
    )

    out_p = pl.pallas_call(
        dim_increase_kernel,
        out_shape=jax.ShapeDtypeStruct((b_eff, np_), x.dtype),
        grid_spec=pltpu.PrefetchScalarGridSpec(
            num_scalar_prefetch=0,
            grid=grid,
            in_specs=[
                pl.BlockSpec((tm, tk), lambda j, i, k: (i, k)),   # x tile
                pl.BlockSpec((tk, tn), lambda j, i, k: (k, j)),   # weight tile (resident over M when k_tiles==1)
                pl.BlockSpec((1, tn), lambda j, i, k: (0, j)),    # bias tile
            ],
            out_specs=pl.BlockSpec((tm, tn), lambda j, i, k: (i, j)),  # constant across K -> accumulator
            scratch_shapes=[pltpu.VMEM((tm, tn), jnp.float32)],
        ),
        compiler_params=pltpu.CompilerParams(
            dimension_semantics=("parallel", "parallel", "arbitrary"),
            vmem_limit_bytes=48 * 1024 * 1024,   # safe headroom under v7x's 64 MiB physical VMEM
        ),
        cost_estimate=cost,
    )(x_p, w_t, b2d)

    if b_eff != B or np_ != out_features:
        return out_p[:B, :out_features]
    return out_p


def _reference(x, weight, bias):
    y = x @ weight.T + bias
    return jnp.where(y > 0, y, NEG_SLOPE * y)


if __name__ == "__main__":
    key = jax.random.PRNGKey(0)

    # ---- small demo at the module's natural shapes -------------------------
    in_features, out_features, batch = 32, 64, 8
    kx, kw, kb = jax.random.split(key, 3)
    x = jax.random.normal(kx, (batch, in_features), dtype=jnp.float32)
    weight = jax.random.normal(kw, (out_features, in_features), dtype=jnp.float32) * 0.1
    bias = jax.random.normal(kb, (out_features,), dtype=jnp.float32) * 0.1

    w_t, b2d = prepare_params(weight, bias)            # one-time, cached transpose + padding
    out = dim_increase_forward(x, w_t, b2d, out_features)
    jax.block_until_ready(out)
    ref = _reference(x, weight, bias)
    assert out.shape == (batch, out_features)
    assert jnp.allclose(out, ref, atol=1e-5, rtol=1e-5)

    # ---- check exercising multi-tile K accumulation, non-512 N, partial M block -------------
    in2, out2, b2 = 640, 300, 520
    k2x, k2w, k2b = jax.random.split(jax.random.PRNGKey(1), 3)
    x2 = jax.random.normal(k2x, (b2, in2), dtype=jnp.float32)
    w2 = jax.random.normal(k2w, (out2, in2), dtype=jnp.float32) * 0.05
    bi2 = jax.random.normal(k2b, (out2,), dtype=jnp.float32) * 0.05

    w2_t, b2_2d = prepare_params(w2, bi2)
    out2_arr = dim_increase_forward(x2, w2_t, b2_2d, out2)
    jax.block_until_ready(out2_arr)
    ref2 = _reference(x2, w2, bi2)
    assert out2_arr.shape == (b2, out2)
    assert jnp.allclose(out2_arr, ref2, atol=1e-4, rtol=1e-4)

    # ---- check exercising a batch that is not a multiple of the sublane width ---------------
    x3 = jax.random.normal(jax.random.PRNGKey(2), (5, in_features), dtype=jnp.float32)
    out3 = dim_increase_forward(x3, w_t, b2d, out_features)
    jax.block_until_ready(out3)
    ref3 = _reference(x3, weight, bias)
    assert out3.shape == (5, out_features)
    assert jnp.allclose(out3, ref3, atol=1e-5, rtol=1e-5)

    print("KERNEL_OK")
</pallas_src>

<mosaic_0001>
module attributes {stable_mosaic.version = 11 : i64} {
  func.func @dim_increase_kernel(%arg0: i32, %arg1: i32, %arg2: i32, %arg3: memref<8x128xf32, #tpu.memory_space<vmem>>, %arg4: memref<128x128xf32, #tpu.memory_space<vmem>>, %arg5: memref<1x128xf32, #tpu.memory_space<vmem>>, %arg6: memref<8x128xf32, #tpu.memory_space<vmem>>, %arg7: memref<8x128xf32, #tpu.memory_space<vmem>>) attributes {dimension_semantics = [#tpu.dimension_semantics<parallel>, #tpu.dimension_semantics<parallel>, #tpu.dimension_semantics<arbitrary>], iteration_bounds = array<i64: 1, 1, 1>, scalar_prefetch = 0 : i64, scratch_operands = 1 : i64, tpu.core_type = #tpu.core_type<tc>, window_params = [{transform_indices = @transform_0, window_bounds = array<i64: 8, 128>}, {transform_indices = @transform_1, window_bounds = array<i64: 128, 128>}, {transform_indices = @transform_2, window_bounds = array<i64: 1, 128>}, {transform_indices = @transform_3, window_bounds = array<i64: 8, 128>}]} {
    %c0_i32 = arith.constant 0 : i32
    %0 = arith.cmpi eq, %arg2, %c0_i32 : i32
    %1 = arith.extui %0 : i1 to i32
    %c0_i32_0 = arith.constant 0 : i32
    %2 = arith.cmpi ne, %1, %c0_i32_0 : i32
    scf.if %2 {
      %cst_10 = arith.constant 0.000000e+00 : f32
      %12 = vector.broadcast %cst_10 : f32 to vector<8x128xf32>
      %c0_11 = arith.constant 0 : index
      %c0_12 = arith.constant 0 : index
      %13 = vector.load %arg7[%c0_11, %c0_12] : memref<8x128xf32, #tpu.memory_space<vmem>>, vector<8x128xf32>
      tpu.vector_store %arg7[%c0_11, %c0_12], %12 {strides = array<i32>} : memref<8x128xf32, #tpu.memory_space<vmem>>, vector<8x128xf32>,
    } else {
    }
    %c0 = arith.constant 0 : index
    %c0_1 = arith.constant 0 : index
    %3 = vector.load %arg7[%c0, %c0_1] : memref<8x128xf32, #tpu.memory_space<vmem>>, vector<8x128xf32>
    %c0_2 = arith.constant 0 : index
    %c0_3 = arith.constant 0 : index
    %4 = vector.load %arg3[%c0_2, %c0_3] : memref<8x128xf32, #tpu.memory_space<vmem>>, vector<8x128xf32>
    %c0_4 = arith.constant 0 : index
    %c0_5 = arith.constant 0 : index
    %5 = vector.load %arg4[%c0_4, %c0_5] : memref<128x128xf32, #tpu.memory_space<vmem>>, vector<128x128xf32>
    %cst = arith.constant dense<0.000000e+00> : vector<8x128xf32>
    %6 = tpu.matmul %4, %5, %cst {dimension_numbers = #tpu.dot_dimension_numbers<[1], [0], [0], [1], [0, 0, 1, 1], [], []>} : vector<8x128xf32>, vector<128x128xf32>, vector<8x128xf32> -> vector<8x128xf32>
    %7 = arith.addf %3, %6 : vector<8x128xf32>
    %c0_6 = arith.constant 0 : index
    %c0_7 = arith.constant 0 : index
    %8 = vector.load %arg7[%c0_6, %c0_7] : memref<8x128xf32, #tpu.memory_space<vmem>>, vector<8x128xf32>
    tpu.vector_store %arg7[%c0_6, %c0_7], %7 {strides = array<i32>} : memref<8x128xf32, #tpu.memory_space<vmem>>, vector<8x128xf32>,
    %c0_i32_8 = arith.constant 0 : i32
    %9 = arith.cmpi eq, %arg2, %c0_i32_8 : i32
    %10 = arith.extui %9 : i1 to i32
    %c0_i32_9 = arith.constant 0 : i32
    %11 = arith.cmpi ne, %10, %c0_i32_9 : i32
    scf.if %11 {
      %c0_10 = arith.constant 0 : index
      %c0_11 = arith.constant 0 : index
      %12 = vector.load %arg7[%c0_10, %c0_11] : memref<8x128xf32, #tpu.memory_space<vmem>>, vector<8x128xf32>
      %c0_12 = arith.constant 0 : index
      %c0_13 = arith.constant 0 : index
      %13 = vector.load %arg5[%c0_12, %c0_13] : memref<1x128xf32, #tpu.memory_space<vmem>>, vector<1x128xf32>
      %14 = vector.broadcast %13 : vector<1x128xf32> to vector<8x128xf32>
      %15 = arith.addf %12, %14 : vector<8x128xf32>
      %cst_14 = arith.constant 0.000000e+00 : f32
      %16 = vector.broadcast %cst_14 : f32 to vector<8x128xf32>
      %17 = arith.cmpf ogt, %15, %16 : vector<8x128xf32>
      %cst_15 = arith.constant 0.00999999977 : f32
      %18 = vector.broadcast %cst_15 : f32 to vector<8x128xf32>
      %19 = arith.mulf %18, %15 : vector<8x128xf32>
      %20 = arith.select %17, %15, %19 : vector<8x128xi1>, vector<8x128xf32>
      %c0_16 = arith.constant 0 : index
      %c0_17 = arith.constant 0 : index
      %21 = vector.load %arg6[%c0_16, %c0_17] : memref<8x128xf32, #tpu.memory_space<vmem>>, vector<8x128xf32>
      tpu.vector_store %arg6[%c0_16, %c0_17], %20 {strides = array<i32>} : memref<8x128xf32, #tpu.memory_space<vmem>>, vector<8x128xf32>,
    } else {
    }
    return
  }
  func.func @transform_0(%arg0: i32, %arg1: i32, %arg2: i32) -> (i32, i32) {
    %c0_i32 = arith.constant 0 : i32
    return %arg1, %arg2 : i32, i32
  }
  func.func @transform_1(%arg0: i32, %arg1: i32, %arg2: i32) -> (i32, i32) {
    %c0_i32 = arith.constant 0 : i32
    return %arg2, %arg0 : i32, i32
  }
  func.func @transform_2(%arg0: i32, %arg1: i32, %arg2: i32) -> (i32, i32) {
    %c0_i32 = arith.constant 0 : i32
    %c0_i32_0 = arith.constant 0 : i32
    return %c0_i32, %arg0 : i32, i32
  }
  func.func @transform_3(%arg0: i32, %arg1: i32, %arg2: i32) -> (i32, i32) {
    %c0_i32 = arith.constant 0 : i32
    return %arg1, %arg0 : i32, i32
  }
}

</mosaic_0001>

<llo_original>
// kernel: tpu_custom_call.1
$region0: #{tpu_custom_call.1}
  #allocation0 [shape = 'u32[]', space=smem, size = 0x4, offset = 0x4, fixed_abs, tag = 'smem constant byte address 0x4 - core index']
  #allocation1 [shape = 'u32[144,128]{1,0:T(1,128)}', space=vmem, size = 0x12000, scoped, tag = 'internal scratch']
  #allocation2 [shape = 'f32[8,128]{1,0:T(8,128)}', space=vmem, size = 0x1000, scoped, tag = 'scratch operand']
  %s0 = inlined_call_operand.hbm [shape: f32[8,128], index: 0, kind: input, shape index: {}]
  %s1 = inlined_call_operand.hbm [shape: f32[128,128], index: 1, kind: input, shape index: {}]
  %s2 = inlined_call_operand.vmem [shape: f32[1,128], index: 2, kind: input, shape index: {}]
  %s3 = inlined_call_operand.hbm [shape: f32[8,128], index: 3, kind: output, shape index: {}]
  %s4 = sld [smem:[#allocation0]]
  $region38: #{tpu_custom_call.1} parent=0
    _
  %s6 = ssub.s32 1, %s4
  %s7 = scalar_select 0, %s6, %s4
  $region1: #{tpu_custom_call.1} parent=0
    #allocation3 [shape = 'u8[4096]{0}', space=vmem, size = 0x1000, scoped, tag = 'input window, operand 0, single buffered']
    #allocation4 [shape = 's32[1]{0}', space=sflag, size = 0x4, scoped, tag = 'scoped memory for tpu_custom_call.1']
    #allocation5 [shape = 's32[1]{0}', space=sflag, size = 0x4, scoped, tag = 'scoped memory for tpu_custom_call.1']
    #allocation6 [shape = 'u8[65536]{0}', space=vmem, size = 0x10000, scoped, tag = 'input window, operand 1, single buffered']
    #allocation7 [shape = 's32[1]{0}', space=sflag, size = 0x4, scoped, tag = 'scoped memory for tpu_custom_call.1']
    #allocation8 [shape = 'u8[4096]{0}', space=vmem, size = 0x1000, scoped, tag = 'output window, operand 0, single buffered']
    %8 = vsyncpa [#allocation4], 0
    %9 = vsyncpa [#allocation7], 0
    %10 = vsyncpa [#allocation5], 0
    // Predicated region
    $region2: #{tpu_custom_call.1} parent=1 // pred_check
      _
    $region3: #{tpu_custom_call.1} parent=1 // pred_check_branch
      %12 = sbr.rel (0) target = $region5
    $region4: #{tpu_custom_call.1} parent=1 // pred_region
      %s14 = ssub.s32 128, 128
      %15 = vsyncadd [#allocation4], %s14
      %s17 = sshll.u32 [#allocation3], 4
      %s18 = int_to_ptr.vmem [resolvable:$true] %s17
      %20 = dma.hbm_to_vmem [thread:$0]  %s0, 128, %s18, [#allocation4]
    $region5: #{tpu_custom_call.1} parent=1 // pred_fallthru
      _
    // Predicated region
    $region6: #{tpu_custom_call.1} parent=1 // pred_check
      _
    $region7: #{tpu_custom_call.1} parent=1 // pred_check_branch
      %22 = sbr.rel (0) target = $region9
    $region8: #{tpu_custom_call.1} parent=1 // pred_region
      %s24 = ssub.s32 2048, 2048
      %25 = vsyncadd [#allocation7], %s24
      %s26 = sshll.u32 [#allocation6], 4
      %s27 = int_to_ptr.vmem [resolvable:$true] %s26
      %32 = dma.hbm_to_vmem [thread:$0]  %s1, 2048, %s27, [#allocation7], 128, 128, 8
    $region9: #{tpu_custom_call.1} parent=1 // pred_fallthru
      _
    // Predicated region
    $region10: #{tpu_custom_call.1} parent=1 // pred_check
      _
    $region11: #{tpu_custom_call.1} parent=1 // pred_check_branch
      %34 = sbr.rel (0) target = $region13
    $region12: #{tpu_custom_call.1} parent=1 // pred_region
      _
    $region13: #{tpu_custom_call.1} parent=1 // pred_fallthru
      _
    // Predicated region
    $region14: #{tpu_custom_call.1} parent=1 // pred_check
      _
    $region15: #{tpu_custom_call.1} parent=1 // pred_check_branch
      %36 = sbr.rel (0) target = $region17
    $region16: #{tpu_custom_call.1} parent=1 // pred_region
      %37 = dma.done [#allocation4], 128
    $region17: #{tpu_custom_call.1} parent=1 // pred_fallthru
      _
    // Predicated region
    $region18: #{tpu_custom_call.1} parent=1 // pred_check
      _
    $region19: #{tpu_custom_call.1} parent=1 // pred_check_branch
      %39 = sbr.rel (0) target = $region21
    $region20: #{tpu_custom_call.1} parent=1 // pred_region
      %40 = dma.done [#allocation7], 2048
    $region21: #{tpu_custom_call.1} parent=1 // pred_fallthru
      _
    %p41 = scmp.eq.s32.totalorder 0, 0
    // Predicated region
    $region22: #{tpu_custom_call.1} parent=1 // pred_check
      %p42 = pneg %p41
    $region23: #{tpu_custom_call.1} parent=1 // pred_check_branch
      %44 = sbr.rel (%p42) target = $region25
    $region24: #{tpu_custom_call.1} parent=1 // pred_region
      %45 = vst [vmem:[#allocation2] sm:$0xff] 0.0
    $region25: #{tpu_custom_call.1} parent=1 // pred_fallthru
      _
    %v46 = vld [vmem:[#allocation2] sm:$0xff]
    %v47 = vld [vmem:[#allocation3] sm:$0xff]
    %v48 = vld [vmem:[#allocation6] sm:$0xff]
    %v49 = vld [vmem:[#allocation6 + $0x8] sm:$0xff]
    %v50 = vld [vmem:[#allocation6 + $0x10] sm:$0xff]
    %v51 = vld [vmem:[#allocation6 + $0x18] sm:$0xff]
    %v52 = vld [vmem:[#allocation6 + $0x20] sm:$0xff]
    %v53 = vld [vmem:[#allocation6 + $0x28] sm:$0xff]
    %v54 = vld [vmem:[#allocation6 + $0x30] sm:$0xff]
    %v55 = vld [vmem:[#allocation6 + $0x38] sm:$0xff]
    %v56 = vld [vmem:[#allocation6 + $0x40] sm:$0xff]
    %v57 = vld [vmem:[#allocation6 + $0x48] sm:$0xff]
    %v58 = vld [vmem:[#allocation6 + $0x50] sm:$0xff]
    %v59 = vld [vmem:[#allocation6 + $0x58] sm:$0xff]
    %v60 = vld [vmem:[#allocation6 + $0x60] sm:$0xff]
    %v61 = vld [vmem:[#allocation6 + $0x68] sm:$0xff]
    %v62 = vld [vmem:[#allocation6 + $0x70] sm:$0xff]
    %v63 = vld [vmem:[#allocation6 + $0x78] sm:$0xff]
    %64 = vmatprep.subr.mxu0 0.0
    %65 = vmatpush1.msra.mxu0 %v63
    %66 = vmatprep.subr.mxu0 0.0
    %67 = vmatpush1.msra.mxu0 %v62
    %68 = vmatprep.subr.mxu0 0.0
    %69 = vmatpush1.msra.mxu0 %v61
    %70 = vmatprep.subr.mxu0 0.0
    %71 = vmatpush1.msra.mxu0 %v60
    %72 = vmatprep.subr.mxu0 0.0
    %73 = vmatpush1.msra.mxu0 %v59
    %74 = vmatprep.subr.mxu0 0.0
    %75 = vmatpush1.msra.mxu0 %v58
    %76 = vmatprep.subr.mxu0 0.0
    %77 = vmatpush1.msra.mxu0 %v57
    %78 = vmatprep.subr.mxu0 0.0
    %79 = vmatpush1.msra.mxu0 %v56
    %80 = vmatprep.subr.mxu0 0.0
    %81 = vmatpush1.msra.mxu0 %v55
    %82 = vmatprep.subr.mxu0 0.0
    %83 = vmatpush1.msra.mxu0 %v54
    %84 = vmatprep.subr.mxu0 0.0
    %85 = vmatpush1.msra.mxu0 %v53
    %86 = vmatprep.subr.mxu0 0.0
    %87 = vmatpush1.msra.mxu0 %v52
    %88 = vmatprep.subr.mxu0 0.0
    %89 = vmatpush1.msra.mxu0 %v51
    %90 = vmatprep.subr.mxu0 0.0
    %91 = vmatpush1.msra.mxu0 %v50
    %92 = vmatprep.subr.mxu0 0.0
    %93 = vmatpush1.msra.mxu0 %v49
    %94 = vmatprep.subr.mxu0 0.0
    %95 = vmatpush1.msra.mxu0 %v48
    %96 = vmatprep.subr.mxu0 0.0
    %97 = vmatpush2.msra.mxu0 0.0
    %98 = vmatprep.subr.mxu0 0.0
    %99 = vmatpush2.msra.mxu0 0.0
    %100 = vmatprep.subr.mxu0 0.0
    %101 = vmatpush2.msra.mxu0 0.0
    %102 = vmatprep.subr.mxu0 0.0
    %103 = vmatpush2.msra.mxu0 0.0
    %104 = vmatprep.subr.mxu0 0.0
    %105 = vmatpush2.msra.mxu0 0.0
    %106 = vmatprep.subr.mxu0 0.0
    %107 = vmatpush2.msra.mxu0 0.0
    %108 = vmatprep.subr.mxu0 0.0
    %109 = vmatpush2.msra.mxu0 0.0
    %110 = vmatprep.subr.mxu0 0.0
    %111 = vmatpush2.msra.mxu0 0.0
    %112 = vmatprep.subr.mxu0 0.0
    %113 = vmatpush2.msra.mxu0 0.0
    %114 = vmatprep.subr.mxu0 0.0
    %115 = vmatpush2.msra.mxu0 0.0
    %116 = vmatprep.subr.mxu0 0.0
    %117 = vmatpush2.msra.mxu0 0.0
    %118 = vmatprep.subr.mxu0 0.0
    %119 = vmatpush2.msra.mxu0 0.0
    %120 = vmatprep.subr.mxu0 0.0
    %121 = vmatpush2.msra.mxu0 0.0
    %122 = vmatprep.subr.mxu0 0.0
    %123 = vmatpush2.msra.mxu0 0.0
    %124 = vmatprep.subr.mxu0 0.0
    %125 = vmatpush2.msra.mxu0 0.0
    %126 = vmatprep.subr.mxu0 0.0
    %127 = vmatpush2.msra.mxu0 0.0
    %128 = vmatprep.mubr.f32.mxu0 0.0
    %129 = vmatmul.mubr.f32.gmra.mxu0 %v47
    %v130 = vpop.f32.mrf.mxu0
    %v131 = vadd.f32 0.0, %v130
    %v132 = vpop.f32.mrf.mxu0
    %133 = vdwg.mxu0
    %v134 = vadd.f32 %v46, %v131
    %135 = vst [vmem:[#allocation2] sm:$0xff] %v134
    // Predicated region
    $region26: #{tpu_custom_call.1} parent=1 // pred_check
      %p136 = pneg %p41
    $region27: #{tpu_custom_call.1} parent=1 // pred_check_branch
      %138 = sbr.rel (%p136) target = $region29
    $region28: #{tpu_custom_call.1} parent=1 // pred_region
      %v139 = vld [vmem:[#allocation2] sm:$0xff]
      %v140 = vld [vmem:[%s2] sm:$0x1]
      %v142 = vlaneseq
      %v143 = vshrl.u32 %v142, 7
      %v144 = vsub.s32 0, %v143
      %v145 = vrot.slane %v140, %v144
      %v147 = vadd.f32 %v139, %v145
      %vm148 = vcmp.gt.f32.partialorder %v147, 0.0
      %v149 = vmul.f32 %v147, 0.01
      %v150 = vsel %vm148, %v147, %v149
      %151 = vst [vmem:[#allocation8] sm:$0xff] %v150
    $region29: #{tpu_custom_call.1} parent=1 // pred_fallthru
      _
    // Predicated region
    $region30: #{tpu_custom_call.1} parent=1 // pred_check
      _
    $region31: #{tpu_custom_call.1} parent=1 // pred_check_branch
      %153 = sbr.rel (0) target = $region33
    $region32: #{tpu_custom_call.1} parent=1 // pred_region
      %s155 = ssub.s32 128, 128
      %156 = vsyncadd [#allocation5], %s155
      %s158 = sshll.u32 [#allocation8], 4
      %s159 = int_to_ptr.vmem [resolvable:$true] %s158
      %161 = dma.vmem_to_hbm [thread:$0]  %s159, 128, %s3, [#allocation5]
    $region33: #{tpu_custom_call.1} parent=1 // pred_fallthru
      _
    // Predicated region
    $region34: #{tpu_custom_call.1} parent=1 // pred_check
      _
    $region35: #{tpu_custom_call.1} parent=1 // pred_check_branch
      %163 = sbr.rel (0) target = $region37
    $region36: #{tpu_custom_call.1} parent=1 // pred_region
      %164 = dma.done [#allocation5], 128
    $region37: #{tpu_custom_call.1} parent=1 // pred_fallthru
      _
    %165 = vsyncpa [#allocation4], 1
    %166 = vsyncpa [#allocation7], 1
    %167 = vsyncpa [#allocation5], 1

</llo_original>
